<compile_context>
chip_gen: v6e
topology: v6e:2x2x1
jax: 0.10.0
libtpu: 0.0.40
codegen_flags: <defaults>
</compile_context>

<pallas_src>
import jax
import jax.numpy as jnp
from jax.experimental import pallas as pl
from jax.experimental.pallas import tpu as pltpu


def prompt_learner_kernel(x_ref, w1_ref, w2_ref, bias_ref, out_ref):
    # x: (B, vis_dim) f32; w1: (vis_dim, hidden) bf16; w2: (hidden, ctx_dim) bf16
    # bias: (2, ctx_dim) f32 — row 0 = (ctx @ w1 + b1) zero-padded to ctx_dim,
    #                          row 1 = b2.
    hidden = w1_ref.shape[1]

    x = x_ref[...].astype(jnp.bfloat16)
    # linear1 (+ folded ctx bias) + ReLU: bf16 MXU operands, f32 acc/epilogue.
    h = jnp.dot(x, w1_ref[...], preferred_element_type=jnp.float32)
    h = h + bias_ref[0:1, 0:hidden]
    h = jnp.maximum(h, 0.0)
    # linear2: bf16 MXU operands, f32 acc/epilogue.
    y = jnp.dot(h.astype(jnp.bfloat16), w2_ref[...],
                preferred_element_type=jnp.float32)
    y = y + bias_ref[1:2, :]
    out_ref[...] = y.astype(out_ref.dtype)


def prepare_prompt_learner_params(ctx, w1, b1, w2, b2):
    """One-time parameter prep.

    Folds ctx into the first-layer bias, casts weights to bf16, and packs both
    biases into a single (2, ctx_dim) f32 array (fewer prologue DMAs).
    """
    vis_dim, hidden = w1.shape
    hidden2, ctx_dim = w2.shape
    assert hidden2 == hidden, (hidden2, hidden)
    assert ctx.shape == (1, vis_dim), (ctx.shape, vis_dim)      # module hard-codes (1, 512)
    assert hidden <= ctx_dim, (hidden, ctx_dim)

    b1_eff = (ctx.astype(jnp.float32) @ w1.astype(jnp.float32)
              + b1.astype(jnp.float32).reshape(1, hidden))       # (1, hidden) f32
    b1_row = jnp.zeros((1, ctx_dim), jnp.float32).at[:, :hidden].set(b1_eff)
    bias_packed = jnp.concatenate(
        [b1_row, b2.astype(jnp.float32).reshape(1, ctx_dim)], axis=0)  # (2, ctx_dim)

    return w1.astype(jnp.bfloat16), w2.astype(jnp.bfloat16), bias_packed


def prompt_learner_forward(im_features, w1_bf16, w2_bf16, bias_packed,
                           out_dtype=jnp.float32):
    B, vis_dim = im_features.shape
    hidden = w1_bf16.shape[1]
    ctx_dim = w2_bf16.shape[1]

    # Advisory cost hint for XLA's scheduler around this tiny custom call.
    flops = 2 * B * vis_dim * hidden + 2 * B * hidden * ctx_dim
    bytes_accessed = (
        im_features.size * im_features.dtype.itemsize
        + w1_bf16.size * 2 + w2_bf16.size * 2
        + bias_packed.size * 4
        + B * ctx_dim * jnp.dtype(out_dtype).itemsize)

    vmem = pl.BlockSpec(memory_space=pltpu.MemorySpace.VMEM)

    out2d = pl.pallas_call(
        prompt_learner_kernel,
        out_shape=jax.ShapeDtypeStruct((B, ctx_dim), out_dtype),
        in_specs=[vmem, vmem, vmem, vmem],   # whole arrays, single VMEM tile
        out_specs=vmem,
        cost_estimate=pl.CostEstimate(
            flops=flops, transcendentals=0, bytes_accessed=bytes_accessed),
    )(im_features, w1_bf16, w2_bf16, bias_packed)

    # unsqueeze(1) -> (B, 1, ctx_dim); pure layout glue outside the kernel.
    return out2d[:, None, :]


def reference_forward(im_features, ctx, w1, b1, w2, b2):
    x = im_features + ctx
    h = jnp.maximum(x @ w1 + b1, 0.0)
    y = h @ w2 + b2
    return y[:, None, :]


if __name__ == "__main__":
    # Shapes implied by the module: ctx is hard-coded (1, 512) so vis_dim = 512.
    # CLIP-like dims: vis_dim = ctx_dim = 512, hidden = vis_dim // 16 = 32.
    B = 2
    VIS_DIM = 512
    CTX_DIM = 512
    HIDDEN = VIS_DIM // 16  # 32

    key = jax.random.PRNGKey(0)
    k_x, k_ctx, k_w1, k_b1, k_w2, k_b2 = jax.random.split(key, 6)

    im_features = jax.random.normal(k_x, (B, VIS_DIM), dtype=jnp.float32)

    # Deterministic synthetic parameters (no checkpoint load):
    ctx = 0.02 * jax.random.normal(k_ctx, (1, VIS_DIM), dtype=jnp.float32)
    w1 = 0.02 * jax.random.normal(k_w1, (VIS_DIM, HIDDEN), dtype=jnp.float32)
    b1 = 0.01 * jax.random.normal(k_b1, (1, HIDDEN), dtype=jnp.float32)
    w2 = 0.02 * jax.random.normal(k_w2, (HIDDEN, CTX_DIM), dtype=jnp.float32)
    b2 = 0.01 * jax.random.normal(k_b2, (1, CTX_DIM), dtype=jnp.float32)

    # One-time parameter prep (fold ctx into b1, pack biases, bf16 weights).
    w1_bf16, w2_bf16, bias_packed = prepare_prompt_learner_params(
        ctx, w1, b1, w2, b2)

    out = prompt_learner_forward(im_features, w1_bf16, w2_bf16, bias_packed)
    out = jax.block_until_ready(out)

    ref = reference_forward(im_features, ctx, w1, b1, w2, b2)
    assert out.shape == (B, 1, CTX_DIM), out.shape
    # bf16 MXU operands -> relaxed tolerance vs the f32 reference.
    assert jnp.allclose(out, ref, atol=1e-2, rtol=1e-2), \
        float(jnp.max(jnp.abs(out - ref)))

    print("KERNEL_OK")
</pallas_src>

<mosaic_0001>
module attributes {stable_mosaic.version = 11 : i64} {
  func.func @prompt_learner_kernel(%arg0: memref<2x512xf32, #tpu.memory_space<vmem>>, %arg1: memref<512x32xbf16, #tpu.memory_space<vmem>>, %arg2: memref<32x512xbf16, #tpu.memory_space<vmem>>, %arg3: memref<2x512xf32, #tpu.memory_space<vmem>>, %arg4: memref<2x512xf32, #tpu.memory_space<vmem>>) attributes {dimension_semantics = [], scalar_prefetch = 0 : i64, scratch_operands = 0 : i64, tpu.core_type = #tpu.core_type<tc>} {
    %c0 = arith.constant 0 : index
    %c0_0 = arith.constant 0 : index
    %0 = vector.load %arg0[%c0, %c0_0] : memref<2x512xf32, #tpu.memory_space<vmem>>, vector<2x512xf32>
    %1 = arith.truncf %0 : vector<2x512xf32> to vector<2x512xbf16>
    %c0_1 = arith.constant 0 : index
    %c0_2 = arith.constant 0 : index
    %2 = vector.load %arg1[%c0_1, %c0_2] : memref<512x32xbf16, #tpu.memory_space<vmem>>, vector<512x32xbf16>
    %cst = arith.constant dense<0.000000e+00> : vector<2x32xf32>
    %3 = tpu.matmul %1, %2, %cst {dimension_numbers = #tpu.dot_dimension_numbers<[1], [0], [0], [1], [0, 0, 1, 1], [], []>} : vector<2x512xbf16>, vector<512x32xbf16>, vector<2x32xf32> -> vector<2x32xf32>
    %c0_3 = arith.constant 0 : index
    %c0_4 = arith.constant 0 : index
    %4 = vector.load %arg3[%c0_3, %c0_4] : memref<2x512xf32, #tpu.memory_space<vmem>>, vector<1x32xf32>
    %5 = vector.broadcast %4 : vector<1x32xf32> to vector<2x32xf32>
    %6 = arith.addf %3, %5 : vector<2x32xf32>
    %cst_5 = arith.constant 0.000000e+00 : f32
    %7 = vector.broadcast %cst_5 : f32 to vector<2x32xf32>
    %8 = arith.maximumf %6, %7 : vector<2x32xf32>
    %9 = arith.truncf %8 : vector<2x32xf32> to vector<2x32xbf16>
    %c0_6 = arith.constant 0 : index
    %c0_7 = arith.constant 0 : index
    %10 = vector.load %arg2[%c0_6, %c0_7] : memref<32x512xbf16, #tpu.memory_space<vmem>>, vector<32x512xbf16>
    %cst_8 = arith.constant dense<0.000000e+00> : vector<2x512xf32>
    %11 = tpu.matmul %9, %10, %cst_8 {dimension_numbers = #tpu.dot_dimension_numbers<[1], [0], [0], [1], [0, 0, 1, 1], [], []>} : vector<2x32xbf16>, vector<32x512xbf16>, vector<2x512xf32> -> vector<2x512xf32>
    %c1 = arith.constant 1 : index
    %c0_9 = arith.constant 0 : index
    %12 = vector.load %arg3[%c1, %c0_9] : memref<2x512xf32, #tpu.memory_space<vmem>>, vector<1x512xf32>
    %13 = vector.broadcast %12 : vector<1x512xf32> to vector<2x512xf32>
    %14 = arith.addf %11, %13 : vector<2x512xf32>
    %c0_10 = arith.constant 0 : index
    %c0_11 = arith.constant 0 : index
    %15 = vector.load %arg4[%c0_10, %c0_11] : memref<2x512xf32, #tpu.memory_space<vmem>>, vector<2x512xf32>
    tpu.vector_store %arg4[%c0_10, %c0_11], %14 {strides = array<i32>} : memref<2x512xf32, #tpu.memory_space<vmem>>, vector<2x512xf32>,
    return
  }
}

</mosaic_0001>

<llo_original>
// kernel: tpu_custom_call.1
$region0: #{tpu_custom_call.1}
  #allocation0 [shape = 'u32[]', space=smem, size = 0x4, offset = 0x4, fixed_abs, tag = 'smem constant byte address 0x4 - core index']
  #allocation1 [shape = 'u32[144,128]{1,0:T(1,128)}', space=vmem, size = 0x12000, scoped, tag = 'internal scratch']
  %s0 = inlined_call_operand.vmem [shape: f32[2,512], index: 0, kind: input, shape index: {}]
  %s1 = inlined_call_operand.vmem [shape: bf16[512,32], index: 1, kind: input, shape index: {}]
  %s2 = inlined_call_operand.vmem [shape: bf16[32,512], index: 2, kind: input, shape index: {}]
  %s3 = inlined_call_operand.vmem [shape: f32[2,512], index: 3, kind: input, shape index: {}]
  %s4 = inlined_call_operand.hbm [shape: f32[2,512], index: 4, kind: output, shape index: {}]
  %s5 = sld [smem:[#allocation0]]
  $region26: #{tpu_custom_call.1} parent=0
    _
  %s7 = ssub.s32 1, %s5
  %s8 = scalar_select 0, %s7, %s5
  $region1: #{tpu_custom_call.1} parent=0
    #allocation2 [shape = 'u8[4096]{0}', space=vmem, size = 0x1000, scoped, tag = 'output window, operand 0, single buffered']
    #allocation3 [shape = 's32[1]{0}', space=sflag, size = 0x4, scoped, tag = 'scoped memory for tpu_custom_call.1']
    %9 = vsyncpa [#allocation3], 0
    // Predicated region
    $region2: #{tpu_custom_call.1} parent=1 // pred_check
      _
    $region3: #{tpu_custom_call.1} parent=1 // pred_check_branch
      %11 = sbr.rel (0) target = $region5
    $region4: #{tpu_custom_call.1} parent=1 // pred_region
      _
    $region5: #{tpu_custom_call.1} parent=1 // pred_fallthru
      _
    // Predicated region
    $region6: #{tpu_custom_call.1} parent=1 // pred_check
      _
    $region7: #{tpu_custom_call.1} parent=1 // pred_check_branch
      %13 = sbr.rel (0) target = $region9
    $region8: #{tpu_custom_call.1} parent=1 // pred_region
      _
    $region9: #{tpu_custom_call.1} parent=1 // pred_fallthru
      _
    // Predicated region
    $region10: #{tpu_custom_call.1} parent=1 // pred_check
      _
    $region11: #{tpu_custom_call.1} parent=1 // pred_check_branch
      %15 = sbr.rel (0) target = $region13
    $region12: #{tpu_custom_call.1} parent=1 // pred_region
      _
    $region13: #{tpu_custom_call.1} parent=1 // pred_fallthru
      _
    // Predicated region
    $region14: #{tpu_custom_call.1} parent=1 // pred_check
      _
    $region15: #{tpu_custom_call.1} parent=1 // pred_check_branch
      %17 = sbr.rel (0) target = $region17
    $region16: #{tpu_custom_call.1} parent=1 // pred_region
      _
    $region17: #{tpu_custom_call.1} parent=1 // pred_fallthru
      _
    %v19 = vld [vmem:[%s0] sm:$0xff]
    %v21 = vcombine.high %v19, %v19
    %v23 = vunpack.c.l.s4 1983009808
    %v24 = vunpack.c.0.s8 %v23
    %v25 = vlaneseq
    %v26 = vshrl.u32 %v25, 7
    %v27 = vsub.s32 %v24, %v26
    %v28 = vrot.slane %v19, %v27
    %v30 = vunpack.c.l.s4 1983009808
    %v31 = vunpack.c.0.s8 %v30
    %v32 = vlaneseq
    %v33 = vshrl.u32 %v32, 7
    %v34 = vsub.s32 %v31, %v33
    %v35 = vrot.slane %v21, %v34
    %v36 = vcombine.high %v28, %v28
    %v37 = vcombine.high %v35, %v35
    %v42 = vpack.c.bf16 %v28, %v28
    %v43 = vpack.c.bf16 %v36, %v36
    %v44 = vpack.c.bf16 %v35, %v35
    %v45 = vpack.c.bf16 %v37, %v37
    %v46 = vld [vmem:[%s1] sm:$0xf]
    %v47 = vld [vmem:[%s1 + $0x4] sm:$0xf]
    %v48 = vld [vmem:[%s1 + $0x8] sm:$0xf]
    %v49 = vld [vmem:[%s1 + $0xc] sm:$0xf]
    %v50 = vld [vmem:[%s1 + $0x10] sm:$0xf]
    %v51 = vld [vmem:[%s1 + $0x14] sm:$0xf]
    %v52 = vld [vmem:[%s1 + $0x18] sm:$0xf]
    %v53 = vld [vmem:[%s1 + $0x1c] sm:$0xf]
    %v54 = vld [vmem:[%s1 + $0x20] sm:$0xf]
    %v55 = vld [vmem:[%s1 + $0x24] sm:$0xf]
    %v56 = vld [vmem:[%s1 + $0x28] sm:$0xf]
    %v57 = vld [vmem:[%s1 + $0x2c] sm:$0xf]
    %v58 = vld [vmem:[%s1 + $0x30] sm:$0xf]
    %v59 = vld [vmem:[%s1 + $0x34] sm:$0xf]
    %v60 = vld [vmem:[%s1 + $0x38] sm:$0xf]
    %v61 = vld [vmem:[%s1 + $0x3c] sm:$0xf]
    %v62 = vld [vmem:[%s1 + $0x40] sm:$0xf]
    %v63 = vld [vmem:[%s1 + $0x44] sm:$0xf]
    %v64 = vld [vmem:[%s1 + $0x48] sm:$0xf]
    %v65 = vld [vmem:[%s1 + $0x4c] sm:$0xf]
    %v66 = vld [vmem:[%s1 + $0x50] sm:$0xf]
    %v67 = vld [vmem:[%s1 + $0x54] sm:$0xf]
    %v68 = vld [vmem:[%s1 + $0x58] sm:$0xf]
    %v69 = vld [vmem:[%s1 + $0x5c] sm:$0xf]
    %v70 = vld [vmem:[%s1 + $0x60] sm:$0xf]
    %v71 = vld [vmem:[%s1 + $0x64] sm:$0xf]
    %v72 = vld [vmem:[%s1 + $0x68] sm:$0xf]
    %v73 = vld [vmem:[%s1 + $0x6c] sm:$0xf]
    %v74 = vld [vmem:[%s1 + $0x70] sm:$0xf]
    %v75 = vld [vmem:[%s1 + $0x74] sm:$0xf]
    %v76 = vld [vmem:[%s1 + $0x78] sm:$0xf]
    %v77 = vld [vmem:[%s1 + $0x7c] sm:$0xf]
    %v78 = vld [vmem:[%s1 + $0x80] sm:$0xf]
    %v79 = vld [vmem:[%s1 + $0x84] sm:$0xf]
    %v80 = vld [vmem:[%s1 + $0x88] sm:$0xf]
    %v81 = vld [vmem:[%s1 + $0x8c] sm:$0xf]
    %v82 = vld [vmem:[%s1 + $0x90] sm:$0xf]
    %v83 = vld [vmem:[%s1 + $0x94] sm:$0xf]
    %v84 = vld [vmem:[%s1 + $0x98] sm:$0xf]
    %v85 = vld [vmem:[%s1 + $0x9c] sm:$0xf]
    %v86 = vld [vmem:[%s1 + $0xa0] sm:$0xf]
    %v87 = vld [vmem:[%s1 + $0xa4] sm:$0xf]
    %v88 = vld [vmem:[%s1 + $0xa8] sm:$0xf]
    %v89 = vld [vmem:[%s1 + $0xac] sm:$0xf]
    %v90 = vld [vmem:[%s1 + $0xb0] sm:$0xf]
    %v91 = vld [vmem:[%s1 + $0xb4] sm:$0xf]
    %v92 = vld [vmem:[%s1 + $0xb8] sm:$0xf]
    %v93 = vld [vmem:[%s1 + $0xbc] sm:$0xf]
    %v94 = vld [vmem:[%s1 + $0xc0] sm:$0xf]
    %v95 = vld [vmem:[%s1 + $0xc4] sm:$0xf]
    %v96 = vld [vmem:[%s1 + $0xc8] sm:$0xf]
    %v97 = vld [vmem:[%s1 + $0xcc] sm:$0xf]
    %v98 = vld [vmem:[%s1 + $0xd0] sm:$0xf]
    %v99 = vld [vmem:[%s1 + $0xd4] sm:$0xf]
    %v100 = vld [vmem:[%s1 + $0xd8] sm:$0xf]
    %v101 = vld [vmem:[%s1 + $0xdc] sm:$0xf]
    %v102 = vld [vmem:[%s1 + $0xe0] sm:$0xf]
    %v103 = vld [vmem:[%s1 + $0xe4] sm:$0xf]
    %v104 = vld [vmem:[%s1 + $0xe8] sm:$0xf]
    %v105 = vld [vmem:[%s1 + $0xec] sm:$0xf]
    %v106 = vld [vmem:[%s1 + $0xf0] sm:$0xf]
    %v107 = vld [vmem:[%s1 + $0xf4] sm:$0xf]
    %v108 = vld [vmem:[%s1 + $0xf8] sm:$0xf]
    %v109 = vld [vmem:[%s1 + $0xfc] sm:$0xf]
    %v110 = vld [vmem:[%s3] sm:$0x1]
    %v111 = vlaneseq
    %v112 = vshrl.u32 %v111, 7
    %v113 = vsub.s32 0, %v112
    %v114 = vrot.slane %v110, %v113
    %v179 = vunpack.c.l.b16 %v46
    %v180 = vunpack.c.l.b16 %v47
    %v181 = vunpack.c.l.b16 %v48
    %v182 = vunpack.c.l.b16 %v49
    %v183 = vunpack.c.l.b16 %v50
    %v184 = vunpack.c.l.b16 %v51
    %v185 = vunpack.c.l.b16 %v52
    %v186 = vunpack.c.l.b16 %v53
    %v187 = vunpack.c.l.b16 %v54
    %v188 = vunpack.c.l.b16 %v55
    %v189 = vunpack.c.l.b16 %v56
    %v190 = vunpack.c.l.b16 %v57
    %v191 = vunpack.c.l.b16 %v58
    %v192 = vunpack.c.l.b16 %v59
    %v193 = vunpack.c.l.b16 %v60
    %v194 = vunpack.c.l.b16 %v61
    %v195 = vunpack.c.l.b16 %v62
    %v196 = vunpack.c.l.b16 %v63
    %v197 = vunpack.c.l.b16 %v64
    %v198 = vunpack.c.l.b16 %v65
    %v199 = vunpack.c.l.b16 %v66
    %v200 = vunpack.c.l.b16 %v67
    %v201 = vunpack.c.l.b16 %v68
    %v202 = vunpack.c.l.b16 %v69
    %v203 = vunpack.c.l.b16 %v70
    %v204 = vunpack.c.l.b16 %v71
    %v205 = vunpack.c.l.b16 %v72
    %v206 = vunpack.c.l.b16 %v73
    %v207 = vunpack.c.l.b16 %v74
    %v208 = vunpack.c.l.b16 %v75
    %v209 = vunpack.c.l.b16 %v76
    %v210 = vunpack.c.l.b16 %v77
    %v211 = vunpack.c.l.b16 %v78
    %v212 = vunpack.c.l.b16 %v79
    %v213 = vunpack.c.l.b16 %v80
    %v214 = vunpack.c.l.b16 %v81
    %v215 = vunpack.c.l.b16 %v82
    %v216 = vunpack.c.l.b16 %v83
    %v217 = vunpack.c.l.b16 %v84
    %v218 = vunpack.c.l.b16 %v85
    %v219 = vunpack.c.l.b16 %v86
    %v220 = vunpack.c.l.b16 %v87
    %v221 = vunpack.c.l.b16 %v88
    %v222 = vunpack.c.l.b16 %v89
    %v223 = vunpack.c.l.b16 %v90
    %v224 = vunpack.c.l.b16 %v91
    %v225 = vunpack.c.l.b16 %v92
    %v226 = vunpack.c.l.b16 %v93
    %v227 = vunpack.c.l.b16 %v94
    %v228 = vunpack.c.l.b16 %v95
    %v229 = vunpack.c.l.b16 %v96
    %v230 = vunpack.c.l.b16 %v97
    %v231 = vunpack.c.l.b16 %v98
    %v232 = vunpack.c.l.b16 %v99
    %v233 = vunpack.c.l.b16 %v100
    %v234 = vunpack.c.l.b16 %v101
    %v235 = vunpack.c.l.b16 %v102
    %v236 = vunpack.c.l.b16 %v103
    %v237 = vunpack.c.l.b16 %v104
    %v238 = vunpack.c.l.b16 %v105
    %v239 = vunpack.c.l.b16 %v106
    %v240 = vunpack.c.l.b16 %v107
    %v241 = vunpack.c.l.b16 %v108
    %v242 = vunpack.c.l.b16 %v109
    %v243 = vpack.c.b16 %v180, %v179
    %v244 = vpack.c.b16 %v182, %v181
    %v245 = vpack.c.b16 %v184, %v183
    %v246 = vpack.c.b16 %v186, %v185
    %v247 = vpack.c.b16 %v188, %v187
    %v248 = vpack.c.b16 %v190, %v189
    %v249 = vpack.c.b16 %v192, %v191
    %v250 = vpack.c.b16 %v194, %v193
    %v251 = vpack.c.b16 %v196, %v195
    %v252 = vpack.c.b16 %v198, %v197
    %v253 = vpack.c.b16 %v200, %v199
    %v254 = vpack.c.b16 %v202, %v201
    %v255 = vpack.c.b16 %v204, %v203
    %v256 = vpack.c.b16 %v206, %v205
    %v257 = vpack.c.b16 %v208, %v207
    %v258 = vpack.c.b16 %v210, %v209
    %v259 = vpack.c.b16 %v212, %v211
    %v260 = vpack.c.b16 %v214, %v213
    %v261 = vpack.c.b16 %v216, %v215
    %v262 = vpack.c.b16 %v218, %v217
    %v263 = vpack.c.b16 %v220, %v219
    %v264 = vpack.c.b16 %v222, %v221
    %v265 = vpack.c.b16 %v224, %v223
    %v266 = vpack.c.b16 %v226, %v225
    %v267 = vpack.c.b16 %v228, %v227
    %v268 = vpack.c.b16 %v230, %v229
    %v269 = vpack.c.b16 %v232, %v231
    %v270 = vpack.c.b16 %v234, %v233
    %v271 = vpack.c.b16 %v236, %v235
    %v272 = vpack.c.b16 %v238, %v237
    %v273 = vpack.c.b16 %v240, %v239
    %v274 = vpack.c.b16 %v242, %v241
    %307 = vmatprep.subr.bf16.mxu0 0
    %308 = vmatpush1.bf16.msra.mxu0 %v250
    %309 = vmatprep.subr.bf16.mxu0 0
    %310 = vmatpush1.bf16.msra.mxu0 %v249
    %311 = vmatprep.subr.bf16.mxu0 0
    %312 = vmatpush1.bf16.msra.mxu0 %v248
    %313 = vmatprep.subr.bf16.mxu0 0
    %314 = vmatpush1.bf16.msra.mxu0 %v247
    %315 = vmatprep.subr.bf16.mxu0 0
    %316 = vmatpush1.bf16.msra.mxu0 %v246
    %317 = vmatprep.subr.bf16.mxu0 0
    %318 = vmatpush1.bf16.msra.mxu0 %v245
    %319 = vmatprep.subr.bf16.mxu0 0
    %320 = vmatpush1.bf16.msra.mxu0 %v244
    %321 = vmatprep.subr.bf16.mxu0 0
    %322 = vmatpush1.bf16.msra.mxu0 %v243
    %323 = vmatprep.subr.bf16.mxu0 0
    %324 = vmatpush2.bf16.msra.mxu0 %v258
    %325 = vmatprep.subr.bf16.mxu0 0
    %326 = vmatpush2.bf16.msra.mxu0 %v257
    %327 = vmatprep.subr.bf16.mxu0 0
    %328 = vmatpush2.bf16.msra.mxu0 %v256
    %329 = vmatprep.subr.bf16.mxu0 0
    %330 = vmatpush2.bf16.msra.mxu0 %v255
    %331 = vmatprep.subr.bf16.mxu0 0
    %332 = vmatpush2.bf16.msra.mxu0 %v254
    %333 = vmatprep.subr.bf16.mxu0 0
    %334 = vmatpush2.bf16.msra.mxu0 %v253
    %335 = vmatprep.subr.bf16.mxu0 0
    %336 = vmatpush2.bf16.msra.mxu0 %v252
    %337 = vmatprep.subr.bf16.mxu0 0
    %338 = vmatpush2.bf16.msra.mxu0 %v251
    %339 = vmatprep.mubr.bf16.mxu0 %v43
    %340 = vmatmul.mubr.bf16.gmra.mxu0 %v42
    %v341 = vpop.f32.mrf.mxu0
    %v342 = vadd.f32 %v114, %v341
    %v343 = vpop.f32.mrf.mxu0
    %v344 = vpop.f32.mrf.mxu0
    %v345 = vpop.f32.mrf.mxu0
    %346 = vdwg.mxu0
    %347 = vmatprep.subr.bf16.mxu0 0
    %348 = vmatpush1.bf16.msra.mxu0 %v266
    %349 = vmatprep.subr.bf16.mxu0 0
    %350 = vmatpush1.bf16.msra.mxu0 %v265
    %351 = vmatprep.subr.bf16.mxu0 0
    %352 = vmatpush1.bf16.msra.mxu0 %v264
    %353 = vmatprep.subr.bf16.mxu0 0
    %354 = vmatpush1.bf16.msra.mxu0 %v263
    %355 = vmatprep.subr.bf16.mxu0 0
    %356 = vmatpush1.bf16.msra.mxu0 %v262
    %357 = vmatprep.subr.bf16.mxu0 0
    %358 = vmatpush1.bf16.msra.mxu0 %v261
    %359 = vmatprep.subr.bf16.mxu0 0
    %360 = vmatpush1.bf16.msra.mxu0 %v260
    %361 = vmatprep.subr.bf16.mxu0 0
    %362 = vmatpush1.bf16.msra.mxu0 %v259
    %363 = vmatprep.subr.bf16.mxu0 0
    %364 = vmatpush2.bf16.msra.mxu0 %v274
    %365 = vmatprep.subr.bf16.mxu0 0
    %366 = vmatpush2.bf16.msra.mxu0 %v273
    %367 = vmatprep.subr.bf16.mxu0 0
    %368 = vmatpush2.bf16.msra.mxu0 %v272
    %369 = vmatprep.subr.bf16.mxu0 0
    %370 = vmatpush2.bf16.msra.mxu0 %v271
    %371 = vmatprep.subr.bf16.mxu0 0
    %372 = vmatpush2.bf16.msra.mxu0 %v270
    %373 = vmatprep.subr.bf16.mxu0 0
    %374 = vmatpush2.bf16.msra.mxu0 %v269
    %375 = vmatprep.subr.bf16.mxu0 0
    %376 = vmatpush2.bf16.msra.mxu0 %v268
    %377 = vmatprep.subr.bf16.mxu0 0
    %378 = vmatpush2.bf16.msra.mxu0 %v267
    %379 = vmatprep.mubr.bf16.mxu0 %v45
    %380 = vmatmul.mubr.bf16.gmra.mxu0 %v44
    %v381 = vpop.f32.mrf.mxu0
    %v382 = vadd.f32 %v342, %v381
    %v383 = vpop.f32.mrf.mxu0
    %v384 = vpop.f32.mrf.mxu0
    %v385 = vpop.f32.mrf.mxu0
    %386 = vdwg.mxu0
    %v387 = vmax.f32 %v382, 0.0
    %v388 = vpack.c.bf16 %v387, %v387
    %v389 = vld [vmem:[%s2] sm:$0xff]
    %v390 = vld [vmem:[%s2 + $0x8] sm:$0xff]
    %v391 = vld [vmem:[%s2 + $0x10] sm:$0xff]
    %v392 = vld [vmem:[%s2 + $0x18] sm:$0xff]
    %v393 = vld [vmem:[%s2 + $0x20] sm:$0xff]
    %v394 = vld [vmem:[%s2 + $0x28] sm:$0xff]
    %v395 = vld [vmem:[%s2 + $0x30] sm:$0xff]
    %v396 = vld [vmem:[%s2 + $0x38] sm:$0xff]
    %s397 = scalar_lea.vmem %s3, 1
    %v398 = vld [vmem:[%s397] ss:$2 sm:$0xf]
    %v400 = vlaneseq
    %v401 = vshrl.u32 %v400, 7
    %v402 = vsub.s32 0, %v401
    %v403 = vrot.slane %v398, %v402
    %v404 = vlaneseq
    %v405 = vshrl.u32 %v404, 7
    %v406 = vsub.s32 1, %v405
    %v407 = vrot.slane %v398, %v406
    %v408 = vlaneseq
    %v409 = vshrl.u32 %v408, 7
    %v410 = vsub.s32 2, %v409
    %v411 = vrot.slane %v398, %v410
    %v412 = vlaneseq
    %v413 = vshrl.u32 %v412, 7
    %v414 = vsub.s32 3, %v413
    %v415 = vrot.slane %v398, %v414
    %v428 = vunpack.c.l.b16 %v389
    %v429 = vunpack.c.h.b16 %v389
    %v430 = vunpack.c.l.b16 %v390
    %v431 = vunpack.c.h.b16 %v390
    %v432 = vunpack.c.l.b16 %v391
    %v433 = vunpack.c.h.b16 %v391
    %v434 = vunpack.c.l.b16 %v392
    %v435 = vunpack.c.h.b16 %v392
    %v436 = vunpack.c.l.b16 %v393
    %v437 = vunpack.c.h.b16 %v393
    %v438 = vunpack.c.l.b16 %v394
    %v439 = vunpack.c.h.b16 %v394
    %v440 = vunpack.c.l.b16 %v395
    %v441 = vunpack.c.h.b16 %v395
    %v442 = vunpack.c.l.b16 %v396
    %v443 = vunpack.c.h.b16 %v396
    %v444 = vpack.c.b16 %v432, %v428
    %v445 = vpack.c.b16 %v433, %v429
    %v446 = vpack.c.b16 %v434, %v430
    %v447 = vpack.c.b16 %v435, %v431
    %v448 = vpack.c.b16 %v440, %v436
    %v449 = vpack.c.b16 %v441, %v437
    %v450 = vpack.c.b16 %v442, %v438
    %v451 = vpack.c.b16 %v443, %v439
    %vm460 = vcmask 261120
    %v462 = vsel %vm460, %v388, 0
    %464 = vmatprep.subr.bf16.mxu0 0
    %465 = vmatpush1.bf16.msra.mxu0 0
    %466 = vmatprep.subr.bf16.mxu0 0
    %467 = vmatpush1.bf16.msra.mxu0 0
    %468 = vmatprep.subr.bf16.mxu0 0
    %469 = vmatpush1.bf16.msra.mxu0 0
    %470 = vmatprep.subr.bf16.mxu0 0
    %471 = vmatpush1.bf16.msra.mxu0 0
    %472 = vmatprep.subr.bf16.mxu0 0
    %473 = vmatpush1.bf16.msra.mxu0 0
    %474 = vmatprep.subr.bf16.mxu0 0
    %475 = vmatpush1.bf16.msra.mxu0 0
    %476 = vmatprep.subr.bf16.mxu0 %v449
    %477 = vmatpush1.bf16.msra.mxu0 %v448
    %478 = vmatprep.subr.bf16.mxu0 %v445
    %479 = vmatpush1.bf16.msra.mxu0 %v444
    %480 = vmatprep.subr.bf16.mxu0 0
    %481 = vmatpush2.bf16.msra.mxu0 0
    %482 = vmatprep.subr.bf16.mxu0 0
    %483 = vmatpush2.bf16.msra.mxu0 0
    %484 = vmatprep.subr.bf16.mxu0 0
    %485 = vmatpush2.bf16.msra.mxu0 0
    %486 = vmatprep.subr.bf16.mxu0 0
    %487 = vmatpush2.bf16.msra.mxu0 0
    %488 = vmatprep.subr.bf16.mxu0 0
    %489 = vmatpush2.bf16.msra.mxu0 0
    %490 = vmatprep.subr.bf16.mxu0 0
    %491 = vmatpush2.bf16.msra.mxu0 0
    %492 = vmatprep.subr.bf16.mxu0 0
    %493 = vmatpush2.bf16.msra.mxu0 0
    %494 = vmatprep.subr.bf16.mxu0 0
    %495 = vmatpush2.bf16.msra.mxu0 0
    %496 = vmatprep.mubr.bf16.mxu0 0
    %497 = vmatmul.mubr.bf16.gmra.mxu0 %v462
    %v498 = vpop.f32.mrf.mxu0
    %v499 = vadd.f32 %v403, %v498
    %v500 = vpop.f32.mrf.mxu0
    %v501 = vadd.f32 %v407, %v500
    %v502 = vpop.f32.mrf.mxu0
    %v503 = vpop.f32.mrf.mxu0
    %504 = vdwg.mxu0
    %505 = vmatprep.subr.bf16.mxu0 0
    %506 = vmatpush1.bf16.msra.mxu0 0
    %507 = vmatprep.subr.bf16.mxu0 0
    %508 = vmatpush1.bf16.msra.mxu0 0
    %509 = vmatprep.subr.bf16.mxu0 0
    %510 = vmatpush1.bf16.msra.mxu0 0
    %511 = vmatprep.subr.bf16.mxu0 0
    %512 = vmatpush1.bf16.msra.mxu0 0
    %513 = vmatprep.subr.bf16.mxu0 0
    %514 = vmatpush1.bf16.msra.mxu0 0
    %515 = vmatprep.subr.bf16.mxu0 0
    %516 = vmatpush1.bf16.msra.mxu0 0
    %517 = vmatprep.subr.bf16.mxu0 %v451
    %518 = vmatpush1.bf16.msra.mxu0 %v450
    %519 = vmatprep.subr.bf16.mxu0 %v447
    %520 = vmatpush1.bf16.msra.mxu0 %v446
    %521 = vmatprep.subr.bf16.mxu0 0
    %522 = vmatpush2.bf16.msra.mxu0 0
    %523 = vmatprep.subr.bf16.mxu0 0
    %524 = vmatpush2.bf16.msra.mxu0 0
    %525 = vmatprep.subr.bf16.mxu0 0
    %526 = vmatpush2.bf16.msra.mxu0 0
    %527 = vmatprep.subr.bf16.mxu0 0
    %528 = vmatpush2.bf16.msra.mxu0 0
    %529 = vmatprep.subr.bf16.mxu0 0
    %530 = vmatpush2.bf16.msra.mxu0 0
    %531 = vmatprep.subr.bf16.mxu0 0
    %532 = vmatpush2.bf16.msra.mxu0 0
    %533 = vmatprep.subr.bf16.mxu0 0
    %534 = vmatpush2.bf16.msra.mxu0 0
    %535 = vmatprep.subr.bf16.mxu0 0
    %536 = vmatpush2.bf16.msra.mxu0 0
    %537 = vmatprep.mubr.bf16.mxu0 0
    %538 = vmatmul.mubr.bf16.gmra.mxu0 %v462
    %v539 = vpop.f32.mrf.mxu0
    %v540 = vadd.f32 %v411, %v539
    %v541 = vpop.f32.mrf.mxu0
    %v542 = vadd.f32 %v415, %v541
    %v543 = vpop.f32.mrf.mxu0
    %v544 = vpop.f32.mrf.mxu0
    %545 = vdwg.mxu0
    %v550 = vcombine.low %v499, %v501
    %v551 = vcombine.low %v540, %v542
    %v553 = vunpack.c.l.s4 1983009808
    %v554 = vunpack.c.0.s8 %v553
    %v555 = vlaneseq
    %v556 = vshrl.u32 %v555, 7
    %v557 = vsub.s32 %v554, %v556
    %v558 = vrot.slane %v550, %v557
    %v560 = vunpack.c.l.s4 1983009808
    %v561 = vunpack.c.0.s8 %v560
    %v562 = vlaneseq
    %v563 = vshrl.u32 %v562, 7
    %v564 = vsub.s32 %v561, %v563
    %v565 = vrot.slane %v551, %v564
    %v566 = vcombine.low %v558, %v565
    %568 = vst [vmem:[#allocation2] sm:$0xff] %v566
    // Predicated region
    $region18: #{tpu_custom_call.1} parent=1 // pred_check
      _
    $region19: #{tpu_custom_call.1} parent=1 // pred_check_branch
      %570 = sbr.rel (0) target = $region21
    $region20: #{tpu_custom_call.1} parent=1 // pred_region
      %s572 = ssub.s32 128, 128
      %573 = vsyncadd [#allocation3], %s572
      %s575 = sshll.u32 [#allocation2], 4
      %s576 = int_to_ptr.vmem [resolvable:$true] %s575
      %578 = dma.vmem_to_hbm [thread:$0]  %s576, 128, %s4, [#allocation3]
    $region21: #{tpu_custom_call.1} parent=1 // pred_fallthru
      _
    // Predicated region
    $region22: #{tpu_custom_call.1} parent=1 // pred_check
      _
    $region23: #{tpu_custom_call.1} parent=1 // pred_check_branch
      %580 = sbr.rel (0) target = $region25
    $region24: #{tpu_custom_call.1} parent=1 // pred_region
      %581 = dma.done [#allocation3], 128
    $region25: #{tpu_custom_call.1} parent=1 // pred_fallthru
      _
    %582 = vsyncpa [#allocation3], 1

</llo_original>
